<compile_context>
chip_gen: v6e
topology: v6e:2x2x1
jax: 0.10.0
libtpu: 0.0.40
codegen_flags: <defaults>
</compile_context>

<pallas_src>
import jax
import jax.numpy as jnp
from jax.experimental import pallas as pl
from jax.experimental.pallas import tpu as pltpu


def _round_up(n, m):
    return (n + m - 1) // m * m


def cfg_kernel(scale_ref, x_ref, uadd_ref, cdelta_ref, w1_ref, w2_ref, b2_ref, o_ref):
    """One (batch, seq-tile) grid step of the fused CFG denoiser.

    scale_ref  : SMEM [2]              -> [1 - scale, scale]
    x_ref      : VMEM [1, TILE_T, Dp]  (compute dtype, e.g. bf16)
    uadd_ref   : VMEM [1, 1, Hp] f32   -> temb @ W1 + b1  (per batch element)
    cdelta_ref : VMEM [1, 1, Hp] f32   -> cemb @ W1       (per batch element)
    w1_ref     : VMEM [Dp, Hp]         (compute dtype, grid-invariant)
    w2_ref     : VMEM [Hp, Dp]         (compute dtype, grid-invariant)
    b2_ref     : VMEM [1, Dp] f32      (grid-invariant)
    o_ref      : VMEM [1, TILE_T, Dp]
    """
    x = x_ref[0]                                                        # [T, Dp]
    # Shared pre-activation of both CFG branches: (x + temb) @ W1 + b1.
    pre_u = jnp.dot(x, w1_ref[...], preferred_element_type=jnp.float32) + uadd_ref[0]
    pre_c = pre_u + cdelta_ref[0]                                       # + cemb @ W1

    s_u = scale_ref[0]                                                  # 1 - scale
    s_c = scale_ref[1]                                                  # scale
    # CFG combine hoisted before the (affine) W2 projection -> one matmul.
    # TODO(synk): PyTorch nn.GELU defaults to the exact erf form; jax.nn.gelu
    # uses the tanh approximation (same as the in-file JAX reference).
    hid = s_u * jax.nn.gelu(pre_u) + s_c * jax.nn.gelu(pre_c)           # f32 [T, Hp]

    out = jnp.dot(hid.astype(w2_ref.dtype), w2_ref[...],
                  preferred_element_type=jnp.float32) + b2_ref[...]
    o_ref[0] = out.astype(o_ref.dtype)


def timestep_embedding(timesteps, dim):
    """Sinusoidal timestep embedding (plain JAX glue). timesteps [B] -> [B, dim]."""
    assert dim % 2 == 0, "timestep embedding dim must be even"
    half = dim // 2
    freqs = jnp.exp(-jnp.log(10000.0) * jnp.arange(half, dtype=jnp.float32) / half)
    args = timesteps.astype(jnp.float32)[:, None] * freqs[None, :]
    return jnp.concatenate([jnp.cos(args), jnp.sin(args)], axis=-1)


def _vmem_capacity_bytes():
    try:
        return int(pltpu.get_tpu_info().vmem_capacity_bytes)
    except Exception:
        return 64 * 1024 * 1024            # conservative: v7x per-TensorCore VMEM


def classifier_free_forward(x, timesteps, cond_emb, scale, params, *,
                            compute_dtype=jnp.bfloat16, tile_t=None):
    """Pallas-backed equivalent of ClassifierFreeWrapper.forward.

    The y dict of the PyTorch wrapper maps to (cond_emb, scale); both the uncond
    and cond passes of the wrapped model are fused into one kernel.
    """
    B, T, D = x.shape
    H = params["w1"].shape[1]
    f32 = jnp.float32

    # Lane-align feature dims (zero padding is exact: gelu(0) = 0 and padded
    # weight rows/cols are zero).  For tiny D (toy 32) this inflates x/out
    # traffic 4x, accepted; production shapes should use D % 128 == 0 so the
    # pads below are no-ops.
    Dp = _round_up(D, 128)
    Hp = _round_up(H, 128)

    cdt_bytes = jnp.dtype(compute_dtype).itemsize
    out_bytes = jnp.dtype(x.dtype).itemsize

    # ---- explicit VMEM budget -> tile_t ---------------------------------------
    vmem_cap = _vmem_capacity_bytes()
    # Resident: W1 + W2 single-buffered (compute dtype), b2, per-batch add/delta
    # rows (double-buffered f32).
    resident = 2 * Dp * Hp * cdt_bytes + Dp * 4 + 2 * (2 * Hp * 4)
    # Per seq-row: x tile + out tile (double-buffered) + ~4 live f32 [., Hp]
    # slabs inside the body (pre_u, pre_c, gelu temps, hid).
    per_row = 2 * Dp * cdt_bytes + 2 * Dp * out_bytes + 4 * Hp * 4
    budget = int(min(vmem_cap, 128 * 1024 * 1024) * 0.7)
    avail = max(budget - resident, 8 * per_row)

    if tile_t is None:
        tile_t = max(8, min((avail // per_row) // 8 * 8, _round_up(T, 8), 512))
    tile_t = _round_up(tile_t, 8)
    Tp = _round_up(T, tile_t)
    n_t = Tp // tile_t
    # TODO(synk): for very small T, flatten (B, T) into one row axis (with
    # per-row add/delta inputs) so tiles span batch elements and the grid has
    # fewer, larger steps; here tile_t >= T already collapses the grid to (B, 1).

    vmem_limit = int(min(int(vmem_cap * 0.9),
                         max(2 * (resident + per_row * tile_t), 32 * 1024 * 1024)))

    # ---- wrapper-side precompute & (only-if-needed) padding --------------------
    temb = timestep_embedding(timesteps, D)                              # [B, D]
    w1 = params["w1"].astype(f32)
    b1 = params["b1"].astype(f32)
    w2 = params["w2"].astype(f32)
    b2 = params["b2"].astype(f32)

    pad_d, pad_h, pad_t = Dp - D, Hp - H, Tp - T
    x_p = jnp.pad(x, ((0, 0), (0, pad_t), (0, pad_d))) if (pad_d or pad_t) else x
    x_p = x_p.astype(compute_dtype)

    w1_p = jnp.pad(w1, ((0, pad_d), (0, pad_h))) if (pad_d or pad_h) else w1
    w2_p = jnp.pad(w2, ((0, pad_h), (0, pad_d))) if (pad_d or pad_h) else w2
    b1_p = jnp.pad(b1, ((0, 0), (0, pad_h))) if pad_h else b1
    b2_p = jnp.pad(b2, ((0, 0), (0, pad_d))) if pad_d else b2
    temb_p = jnp.pad(temb, ((0, 0), (0, pad_d))) if pad_d else temb
    cemb = cond_emb.astype(f32)
    cemb_p = jnp.pad(cemb, ((0, 0), (0, pad_d))) if pad_d else cemb

    # Hoisted out of the kernel (depend only on the batch index): avoids a
    # redundant single-row MXU matmul every grid step.
    u_add = (temb_p @ w1_p + b1_p)[:, None, :]                           # [B, 1, Hp]
    c_delta = (cemb_p @ w1_p)[:, None, :]                                # [B, 1, Hp]

    # TODO(synk): on v7x, fp8 weights would halve HBM/VMEM again (no int8 MXU
    # path there); bf16 kept here for accuracy.
    w1_c = w1_p.astype(compute_dtype)
    w2_c = w2_p.astype(compute_dtype)
    scales = jnp.asarray([1.0 - scale, scale], dtype=f32)

    flops = 4 * B * Tp * Dp * Hp                        # two MXU matmuls per row
    transcendentals = 2 * B * Tp * Hp                   # two tanh-gelu per hidden elem
    bytes_accessed = (x_p.size * cdt_bytes + B * Tp * Dp * out_bytes
                      + (w1_c.size + w2_c.size) * cdt_bytes
                      + 4 * (u_add.size + c_delta.size + b2_p.size))

    def resident_spec(shp):
        return pl.BlockSpec(shp, lambda b, t: (0,) * len(shp),
                            pipeline_mode=pl.Buffered(1))

    out = pl.pallas_call(
        cfg_kernel,
        out_shape=jax.ShapeDtypeStruct((B, Tp, Dp), x.dtype),
        grid=(B, n_t),
        in_specs=[
            pl.BlockSpec(memory_space=pltpu.MemorySpace.SMEM),           # [1-s, s]
            pl.BlockSpec((1, tile_t, Dp), lambda b, t: (b, t, 0)),       # x tile
            pl.BlockSpec((1, 1, Hp), lambda b, t: (b, 0, 0)),            # temb@W1 + b1
            pl.BlockSpec((1, 1, Hp), lambda b, t: (b, 0, 0)),            # cemb@W1
            resident_spec((Dp, Hp)),                                     # W1 (resident)
            resident_spec((Hp, Dp)),                                     # W2 (resident)
            resident_spec((1, Dp)),                                      # b2 (resident)
        ],
        out_specs=pl.BlockSpec((1, tile_t, Dp), lambda b, t: (b, t, 0)),
        compiler_params=pltpu.CompilerParams(
            dimension_semantics=("parallel", "parallel"),
            vmem_limit_bytes=vmem_limit),
        cost_estimate=pl.CostEstimate(flops=flops,
                                      transcendentals=transcendentals,
                                      bytes_accessed=bytes_accessed),
    )(scales, x_p, u_add, c_delta, w1_c, w2_c, b2_p)

    if pad_d or pad_t:
        out = out[:, :T, :D]
    return out


def reference_forward(x, timesteps, cond_emb, scale, params):
    """Pure-JAX reference mirroring the PyTorch wrapper semantics (two passes)."""
    temb = timestep_embedding(timesteps, x.shape[-1])

    def model(xx, use_cond):
        h = xx + temb[:, None, :]
        if use_cond:
            h = h + cond_emb[:, None, :]
        B, T, D = h.shape
        h2 = h.reshape(B * T, D)
        hid = jax.nn.gelu(h2 @ params["w1"] + params["b1"])
        out = hid @ params["w2"] + params["b2"]
        return out.reshape(B, T, D)

    out = model(x, True)           # y['uncond'] = False
    out_uncond = model(x, False)   # y['uncond'] = True
    return out_uncond + scale * (out - out_uncond)


if __name__ == "__main__":
    B, T, D, H = 2, 16, 32, 64     # batch, seq, latent dim, hidden dim

    key = jax.random.PRNGKey(0)
    k_x, k_c, k_w1, k_w2 = jax.random.split(key, 4)

    x = jax.random.normal(k_x, (B, T, D), dtype=jnp.float32)
    timesteps = jnp.array([10, 250], dtype=jnp.int32)          # one t per batch elem
    cond_emb = jax.random.normal(k_c, (B, D), dtype=jnp.float32)
    scale = 2.5                                                # y['scale']

    params = {
        "w1": jax.random.normal(k_w1, (D, H), dtype=jnp.float32) * 0.05,
        "b1": jnp.zeros((1, H), dtype=jnp.float32),
        "w2": jax.random.normal(k_w2, (H, D), dtype=jnp.float32) * 0.05,
        "b2": jnp.zeros((1, D), dtype=jnp.float32),
    }

    out = classifier_free_forward(x, timesteps, cond_emb, scale, params)
    out = jax.block_until_ready(out)

    ref = reference_forward(x, timesteps, cond_emb, scale, params)
    assert out.shape == (B, T, D)
    # bf16 MXU operands with f32 accumulation -> loose-but-tight-enough tolerance.
    assert jnp.allclose(out, ref, atol=2e-2, rtol=2e-2), "mismatch vs reference"

    print("KERNEL_OK")
</pallas_src>

<mosaic_0001>
module attributes {stable_mosaic.version = 11 : i64} {
  func.func @cfg_kernel(%arg0: i32, %arg1: i32, %arg2: memref<2xf32, #tpu.memory_space<smem>>, %arg3: memref<1x16x128xbf16, #tpu.memory_space<vmem>>, %arg4: memref<1x1x128xf32, #tpu.memory_space<vmem>>, %arg5: memref<1x1x128xf32, #tpu.memory_space<vmem>>, %arg6: memref<128x128xbf16, #tpu.memory_space<vmem>>, %arg7: memref<128x128xbf16, #tpu.memory_space<vmem>>, %arg8: memref<1x128xf32, #tpu.memory_space<vmem>>, %arg9: memref<1x16x128xf32, #tpu.memory_space<vmem>>) attributes {dimension_semantics = [#tpu.dimension_semantics<parallel>, #tpu.dimension_semantics<parallel>], iteration_bounds = array<i64: 2, 1>, scalar_prefetch = 0 : i64, scratch_operands = 0 : i64, tpu.core_type = #tpu.core_type<tc>, window_params = [{transform_indices = @transform_0, window_bounds = array<i64: 2>}, {transform_indices = @transform_1, window_bounds = array<i64: 1, 16, 128>}, {transform_indices = @transform_2, window_bounds = array<i64: 1, 1, 128>}, {transform_indices = @transform_3, window_bounds = array<i64: 1, 1, 128>}, {pipeline_mode = #tpu.pipeline_mode<synchronous>, transform_indices = @transform_4, window_bounds = array<i64: 128, 128>}, {pipeline_mode = #tpu.pipeline_mode<synchronous>, transform_indices = @transform_5, window_bounds = array<i64: 128, 128>}, {pipeline_mode = #tpu.pipeline_mode<synchronous>, transform_indices = @transform_6, window_bounds = array<i64: 1, 128>}, {transform_indices = @transform_7, window_bounds = array<i64: 1, 16, 128>}]} {
    %c0 = arith.constant 0 : index
    %c0_0 = arith.constant 0 : index
    %c0_1 = arith.constant 0 : index
    %0 = vector.load %arg3[%c0, %c0_0, %c0_1] : memref<1x16x128xbf16, #tpu.memory_space<vmem>>, vector<1x16x128xbf16>
    %1 = vector.shape_cast %0 : vector<1x16x128xbf16> to vector<16x128xbf16>
    %c0_2 = arith.constant 0 : index
    %c0_3 = arith.constant 0 : index
    %2 = vector.load %arg6[%c0_2, %c0_3] : memref<128x128xbf16, #tpu.memory_space<vmem>>, vector<128x128xbf16>
    %cst = arith.constant dense<0.000000e+00> : vector<16x128xf32>
    %3 = tpu.matmul %1, %2, %cst {dimension_numbers = #tpu.dot_dimension_numbers<[1], [0], [0], [1], [0, 0, 1, 1], [], []>} : vector<16x128xbf16>, vector<128x128xbf16>, vector<16x128xf32> -> vector<16x128xf32>
    %c0_4 = arith.constant 0 : index
    %c0_5 = arith.constant 0 : index
    %c0_6 = arith.constant 0 : index
    %4 = vector.load %arg4[%c0_4, %c0_5, %c0_6] : memref<1x1x128xf32, #tpu.memory_space<vmem>>, vector<1x1x128xf32>
    %5 = vector.shape_cast %4 : vector<1x1x128xf32> to vector<1x128xf32>
    %6 = vector.broadcast %5 : vector<1x128xf32> to vector<16x128xf32>
    %7 = arith.addf %3, %6 : vector<16x128xf32>
    %c0_7 = arith.constant 0 : index
    %c0_8 = arith.constant 0 : index
    %c0_9 = arith.constant 0 : index
    %8 = vector.load %arg5[%c0_7, %c0_8, %c0_9] : memref<1x1x128xf32, #tpu.memory_space<vmem>>, vector<1x1x128xf32>
    %9 = vector.shape_cast %8 : vector<1x1x128xf32> to vector<1x128xf32>
    %10 = vector.broadcast %9 : vector<1x128xf32> to vector<16x128xf32>
    %11 = arith.addf %7, %10 : vector<16x128xf32>
    %c0_10 = arith.constant 0 : index
    %12 = memref.load %arg2[%c0_10] : memref<2xf32, #tpu.memory_space<smem>>
    %c1 = arith.constant 1 : index
    %13 = memref.load %arg2[%c1] : memref<2xf32, #tpu.memory_space<smem>>
    %14 = arith.mulf %7, %7 : vector<16x128xf32>
    %15 = arith.mulf %7, %14 : vector<16x128xf32>
    %cst_11 = arith.constant 4.471500e-02 : f32
    %16 = vector.broadcast %cst_11 : f32 to vector<16x128xf32>
    %17 = arith.mulf %16, %15 : vector<16x128xf32>
    %18 = arith.addf %7, %17 : vector<16x128xf32>
    %cst_12 = arith.constant 0.797884583 : f32
    %19 = vector.broadcast %cst_12 : f32 to vector<16x128xf32>
    %20 = arith.mulf %19, %18 : vector<16x128xf32>
    %21 = math.tanh %20 : vector<16x128xf32>
    %cst_13 = arith.constant 1.000000e+00 : f32
    %22 = vector.broadcast %cst_13 : f32 to vector<16x128xf32>
    %23 = arith.addf %22, %21 : vector<16x128xf32>
    %cst_14 = arith.constant 5.000000e-01 : f32
    %24 = vector.broadcast %cst_14 : f32 to vector<16x128xf32>
    %25 = arith.mulf %24, %23 : vector<16x128xf32>
    %26 = arith.mulf %7, %25 : vector<16x128xf32>
    %27 = vector.broadcast %12 : f32 to vector<16x128xf32>
    %28 = arith.mulf %27, %26 : vector<16x128xf32>
    %29 = arith.mulf %11, %11 : vector<16x128xf32>
    %30 = arith.mulf %11, %29 : vector<16x128xf32>
    %cst_15 = arith.constant 4.471500e-02 : f32
    %31 = vector.broadcast %cst_15 : f32 to vector<16x128xf32>
    %32 = arith.mulf %31, %30 : vector<16x128xf32>
    %33 = arith.addf %11, %32 : vector<16x128xf32>
    %cst_16 = arith.constant 0.797884583 : f32
    %34 = vector.broadcast %cst_16 : f32 to vector<16x128xf32>
    %35 = arith.mulf %34, %33 : vector<16x128xf32>
    %36 = math.tanh %35 : vector<16x128xf32>
    %cst_17 = arith.constant 1.000000e+00 : f32
    %37 = vector.broadcast %cst_17 : f32 to vector<16x128xf32>
    %38 = arith.addf %37, %36 : vector<16x128xf32>
    %cst_18 = arith.constant 5.000000e-01 : f32
    %39 = vector.broadcast %cst_18 : f32 to vector<16x128xf32>
    %40 = arith.mulf %39, %38 : vector<16x128xf32>
    %41 = arith.mulf %11, %40 : vector<16x128xf32>
    %42 = vector.broadcast %13 : f32 to vector<16x128xf32>
    %43 = arith.mulf %42, %41 : vector<16x128xf32>
    %44 = arith.addf %28, %43 : vector<16x128xf32>
    %45 = arith.truncf %44 : vector<16x128xf32> to vector<16x128xbf16>
    %c0_19 = arith.constant 0 : index
    %c0_20 = arith.constant 0 : index
    %46 = vector.load %arg7[%c0_19, %c0_20] : memref<128x128xbf16, #tpu.memory_space<vmem>>, vector<128x128xbf16>
    %cst_21 = arith.constant dense<0.000000e+00> : vector<16x128xf32>
    %47 = tpu.matmul %45, %46, %cst_21 {dimension_numbers = #tpu.dot_dimension_numbers<[1], [0], [0], [1], [0, 0, 1, 1], [], []>} : vector<16x128xbf16>, vector<128x128xbf16>, vector<16x128xf32> -> vector<16x128xf32>
    %c0_22 = arith.constant 0 : index
    %c0_23 = arith.constant 0 : index
    %48 = vector.load %arg8[%c0_22, %c0_23] : memref<1x128xf32, #tpu.memory_space<vmem>>, vector<1x128xf32>
    %49 = vector.broadcast %48 : vector<1x128xf32> to vector<16x128xf32>
    %50 = arith.addf %47, %49 : vector<16x128xf32>
    %c0_24 = arith.constant 0 : index
    %c0_25 = arith.constant 0 : index
    %c0_26 = arith.constant 0 : index
    %51 = vector.load %arg9[%c0_24, %c0_25, %c0_26] : memref<1x16x128xf32, #tpu.memory_space<vmem>>, vector<1x16x128xf32>
    %52 = vector.shape_cast %51 : vector<1x16x128xf32> to vector<16x128xf32>
    %53 = vector.shape_cast %50 : vector<16x128xf32> to vector<1x16x128xf32>
    tpu.vector_store %arg9[%c0_24, %c0_25, %c0_26], %53 {strides = array<i32>} : memref<1x16x128xf32, #tpu.memory_space<vmem>>, vector<1x16x128xf32>,
    return
  }
  func.func @transform_0(%arg0: i32, %arg1: i32) -> i32 {
    %c0_i32 = arith.constant 0 : i32
    %c0_i32_0 = arith.constant 0 : i32
    return %c0_i32 : i32
  }
  func.func @transform_1(%arg0: i32, %arg1: i32) -> (i32, i32, i32) {
    %c0_i32 = arith.constant 0 : i32
    %c0_i32_0 = arith.constant 0 : i32
    return %arg0, %arg1, %c0_i32 : i32, i32, i32
  }
  func.func @transform_2(%arg0: i32, %arg1: i32) -> (i32, i32, i32) {
    %c0_i32 = arith.constant 0 : i32
    %c0_i32_0 = arith.constant 0 : i32
    %c0_i32_1 = arith.constant 0 : i32
    return %arg0, %c0_i32, %c0_i32_0 : i32, i32, i32
  }
  func.func @transform_3(%arg0: i32, %arg1: i32) -> (i32, i32, i32) {
    %c0_i32 = arith.constant 0 : i32
    %c0_i32_0 = arith.constant 0 : i32
    %c0_i32_1 = arith.constant 0 : i32
    return %arg0, %c0_i32, %c0_i32_0 : i32, i32, i32
  }
  func.func @transform_4(%arg0: i32, %arg1: i32) -> (i32, i32) {
    %c0_i32 = arith.constant 0 : i32
    %c0_i32_0 = arith.constant 0 : i32
    %c0_i32_1 = arith.constant 0 : i32
    return %c0_i32, %c0_i32_0 : i32, i32
  }
  func.func @transform_5(%arg0: i32, %arg1: i32) -> (i32, i32) {
    %c0_i32 = arith.constant 0 : i32
    %c0_i32_0 = arith.constant 0 : i32
    %c0_i32_1 = arith.constant 0 : i32
    return %c0_i32, %c0_i32_0 : i32, i32
  }
  func.func @transform_6(%arg0: i32, %arg1: i32) -> (i32, i32) {
    %c0_i32 = arith.constant 0 : i32
    %c0_i32_0 = arith.constant 0 : i32
    %c0_i32_1 = arith.constant 0 : i32
    return %c0_i32, %c0_i32_0 : i32, i32
  }
  func.func @transform_7(%arg0: i32, %arg1: i32) -> (i32, i32, i32) {
    %c0_i32 = arith.constant 0 : i32
    %c0_i32_0 = arith.constant 0 : i32
    return %arg0, %arg1, %c0_i32 : i32, i32, i32
  }
}

</mosaic_0001>

<llo_original>
// kernel: tpu_custom_call.1
$region0: #{tpu_custom_call.1}
  #allocation0 [shape = 'u32[]', space=smem, size = 0x4, offset = 0x4, fixed_abs, tag = 'smem constant byte address 0x4 - core index']
  #allocation1 [shape = 'u32[144,128]{1,0:T(1,128)}', space=vmem, size = 0x12000, scoped, tag = 'internal scratch']
  %s0 = inlined_call_operand.hbm [shape: f32[2], index: 0, kind: input, shape index: {}]
  %s1 = inlined_call_operand.hbm [shape: bf16[2,16,128], index: 1, kind: input, shape index: {}]
  %s2 = inlined_call_operand.vmem [shape: f32[2,1,128], index: 2, kind: input, shape index: {}]
  %s3 = inlined_call_operand.vmem [shape: f32[2,1,128], index: 3, kind: input, shape index: {}]
  %s4 = inlined_call_operand.hbm [shape: bf16[128,128], index: 4, kind: input, shape index: {}]
  %s5 = inlined_call_operand.hbm [shape: bf16[128,128], index: 5, kind: input, shape index: {}]
  %s6 = inlined_call_operand.vmem [shape: f32[1,128], index: 6, kind: input, shape index: {}]
  %s7 = inlined_call_operand.hbm [shape: f32[2,16,128], index: 7, kind: output, shape index: {}]
  %s8 = sld [smem:[#allocation0]]
  $region77: #{tpu_custom_call.1} parent=0
    _
  %s10 = ssub.s32 1, %s8
  %s11 = scalar_select 0, %s10, %s8
  $region1: #{tpu_custom_call.1} parent=0
    #allocation2 [shape = 'u8[512]{0}', space=smem, size = 0x200, scoped, tag = 'input window, operand 0, single buffered']
    #allocation3 [shape = 's32[2]{0}', space=sflag, size = 0x8, scoped, tag = 'scoped memory for tpu_custom_call.1']
    #allocation4 [shape = 's32[2]{0}', space=sflag, size = 0x8, scoped, tag = 'scoped memory for tpu_custom_call.1']
    #allocation5 [shape = 's32[2]{0}', space=sflag, size = 0x8, scoped, tag = 'scoped memory for tpu_custom_call.1']
    #allocation6 [shape = 'u8[8192]{0}', space=vmem, size = 0x2000, scoped, tag = 'input window, operand 1']
    #allocation7 [shape = 'u8[32768]{0}', space=vmem, size = 0x8000, scoped, tag = 'input window, operand 4, single buffered']
    #allocation8 [shape = 's32[1]{0}', space=sflag, size = 0x4, scoped, tag = 'scoped memory for tpu_custom_call.1']
    #allocation9 [shape = 'u8[32768]{0}', space=vmem, size = 0x8000, scoped, tag = 'input window, operand 5, single buffered']
    #allocation10 [shape = 'u8[16384]{0}', space=vmem, size = 0x4000, scoped, tag = 'output window, operand 0']
    %12 = vsyncpa [#allocation5], 0
    %13 = vsyncpa [#allocation3], 0
    %s14 = scalar_lea.sflag [#allocation3], 1
    %15 = vsyncpa %s14, 0
    %16 = vsyncpa [#allocation8], 0
    %17 = vsyncpa [#allocation4], 0
    %s18 = scalar_lea.sflag [#allocation4], 1
    %19 = vsyncpa %s18, 0
    loop: start=0, step=1, limit=4
    $region2: #{tpu_custom_call.1} parent=1 // loop_pre_header
      _
    $region3: #{tpu_custom_call.1} parent=1 // loop_header
      %s21 = sphi 0, %s25
      %p22 = scmp.ge.s32.totalorder %s21, 4
      %s28 = sphi 0, %s40
      %s29 = sphi 0, %s36
      %s30 = sphi 0, %s28
      %s31 = sphi 0, %s29
      %s32 = sphi 0, %s30
      %s33 = sphi 0, %s31
      %s41 = sphi 0, %s41
      %s43 = sphi 0, %s41
      %s44 = sphi 0, %s43
      %s58 = sphi 0, %s44
      %s66 = sphi 0, %s68
      %s69 = sphi 0, %s66
      %s70 = sphi 0, %s69
      %s86 = sphi 0, %s70
      %s92 = sphi 0, %s94
      %s95 = sphi 0, %s92
      %s96 = sphi 0, %s95
      %s112 = sphi 0, %s96
      %s118 = sphi 0, %s120
      %s121 = sphi 0, %s118
      %s122 = sphi 0, %s121
      %s138 = sphi 0, %s122
      %s142 = sphi 0, %s142
      %s144 = sphi 0, %s142
      %s145 = sphi 0, %s144
      %s159 = sphi 0, %s145
      %s163 = sphi 0, %s163
      %s165 = sphi 0, %s163
      %s166 = sphi 0, %s165
      %s180 = sphi 0, %s166
      %s184 = sphi 0, %s184
      %s186 = sphi 0, %s184
      %s187 = sphi 0, %s186
      %s201 = sphi 0, %s187
      %s209 = sphi 0, %s211
      %s212 = sphi 0, %s209
      %s213 = sphi 0, %s212
      %s229 = sphi 0, %s213
    $region4: #{tpu_custom_call.1} parent=1 // loop_header_branch
      %24 = sbr.rel (%p22) target = $region8
    $region5: #{tpu_custom_call.1} parent=1 // loop_body
      %s26 = ssub.s32 %s21, 1
      %s27 = ssub.s32 %s21, 2
      %s34 = sadd.s32 1, %s29
      %p35 = scmp.ge.s32.totalorder %s34, 1
      %s36 = scalar_select %p35, 0, %s34
      %s37 = sadd.s32 1, %s28
      %s38 = scalar_select %p35, %s37, %s28
      %p39 = scmp.ge.s32.totalorder %s38, 2
      %s40 = scalar_select %p39, 0, %s38
      %s42 = sadd.s32 %s41, 1
      %p45 = scmp.eq.s32.totalorder %s21, 1
      %p46 = scmp.ne.s32.totalorder %s41, %s43
      %p47 = scmp.eq.s32.totalorder %s21, 0
      %p48 = por %p46, %p47
      %p49 = scmp.ne.s32.totalorder %s41, %s43
      %p50 = scmp.eq.s32.totalorder %s26, 1
      %p51 = por %p49, %p50
      %p52 = scmp.ne.s32.totalorder %s43, %s44
      %p53 = scmp.eq.s32.totalorder %s26, 0
      %p54 = por %p52, %p53
      %p55 = scmp.ne.s32.totalorder %s43, %s44
      %p56 = scmp.eq.s32.totalorder %s27, 1
      %p57 = por %p55, %p56
      %p59 = scmp.ne.s32.totalorder %s44, %s58
      %p60 = scmp.eq.s32.totalorder %s27, 0
      %p61 = por %p59, %p60
      %s62 = ssub.s32 %s28, %s40
      %s63 = ssub.s32 %s29, %s36
      %s64 = sor.u32 %s62, %s63
      %p65 = scmp.eq.s32.totalorder %s64, 0
      %s67 = sadd.s32 %s66, 1
      %s68 = scalar_select %p65, %s66, %s67
      %p71 = pneg %p65
      %p72 = scmp.eq.s32.totalorder %s21, 1
      %p73 = por %p71, %p72
      %p74 = scmp.ne.s32.totalorder %s66, %s69
      %p75 = scmp.eq.s32.totalorder %s21, 0
      %p76 = por %p74, %p75
      %p77 = scmp.ne.s32.totalorder %s66, %s69
      %p78 = scmp.eq.s32.totalorder %s26, 1
      %p79 = por %p77, %p78
      %p80 = scmp.ne.s32.totalorder %s69, %s70
      %p81 = scmp.eq.s32.totalorder %s26, 0
      %p82 = por %p80, %p81
      %p83 = scmp.ne.s32.totalorder %s69, %s70
      %p84 = scmp.eq.s32.totalorder %s27, 1
      %p85 = por %p83, %p84
      %p87 = scmp.ne.s32.totalorder %s70, %s86
      %p88 = scmp.eq.s32.totalorder %s27, 0
      %p89 = por %p87, %p88
      %s90 = ssub.s32 %s28, %s40
      %p91 = scmp.eq.s32.totalorder %s90, 0
      %s93 = sadd.s32 %s92, 1
      %s94 = scalar_select %p91, %s92, %s93
      %p97 = pneg %p91
      %p98 = scmp.eq.s32.totalorder %s21, 1
      %p99 = por %p97, %p98
      %p100 = scmp.ne.s32.totalorder %s92, %s95
      %p101 = scmp.eq.s32.totalorder %s21, 0
      %p102 = por %p100, %p101
      %p103 = scmp.ne.s32.totalorder %s92, %s95
      %p104 = scmp.eq.s32.totalorder %s26, 1
      %p105 = por %p103, %p104
      %p106 = scmp.ne.s32.totalorder %s95, %s96
      %p107 = scmp.eq.s32.totalorder %s26, 0
      %p108 = por %p106, %p107
      %p109 = scmp.ne.s32.totalorder %s95, %s96
      %p110 = scmp.eq.s32.totalorder %s27, 1
      %p111 = por %p109, %p110
      %p113 = scmp.ne.s32.totalorder %s96, %s112
      %p114 = scmp.eq.s32.totalorder %s27, 0
      %p115 = por %p113, %p114
      %s116 = ssub.s32 %s28, %s40
      %p117 = scmp.eq.s32.totalorder %s116, 0
      %s119 = sadd.s32 %s118, 1
      %s120 = scalar_select %p117, %s118, %s119
      %p123 = pneg %p117
      %p124 = scmp.eq.s32.totalorder %s21, 1
      %p125 = por %p123, %p124
      %p126 = scmp.ne.s32.totalorder %s118, %s121
      %p127 = scmp.eq.s32.totalorder %s21, 0
      %p128 = por %p126, %p127
      %p129 = scmp.ne.s32.totalorder %s118, %s121
      %p130 = scmp.eq.s32.totalorder %s26, 1
      %p131 = por %p129, %p130
      %p132 = scmp.ne.s32.totalorder %s121, %s122
      %p133 = scmp.eq.s32.totalorder %s26, 0
      %p134 = por %p132, %p133
      %p135 = scmp.ne.s32.totalorder %s121, %s122
      %p136 = scmp.eq.s32.totalorder %s27, 1
      %p137 = por %p135, %p136
      %p139 = scmp.ne.s32.totalorder %s122, %s138
      %p140 = scmp.eq.s32.totalorder %s27, 0
      %p141 = por %p139, %p140
      %s143 = sadd.s32 %s142, 1
      %p146 = scmp.eq.s32.totalorder %s21, 1
      %p147 = scmp.ne.s32.totalorder %s142, %s144
      %p148 = scmp.eq.s32.totalorder %s21, 0
      %p149 = por %p147, %p148
      %p150 = scmp.ne.s32.totalorder %s142, %s144
      %p151 = scmp.eq.s32.totalorder %s26, 1
      %p152 = por %p150, %p151
      %p153 = scmp.ne.s32.totalorder %s144, %s145
      %p154 = scmp.eq.s32.totalorder %s26, 0
      %p155 = por %p153, %p154
      %p156 = scmp.ne.s32.totalorder %s144, %s145
      %p157 = scmp.eq.s32.totalorder %s27, 1
      %p158 = por %p156, %p157
      %p160 = scmp.ne.s32.totalorder %s145, %s159
      %p161 = scmp.eq.s32.totalorder %s27, 0
      %p162 = por %p160, %p161
      %s164 = sadd.s32 %s163, 1
      %p167 = scmp.eq.s32.totalorder %s21, 1
      %p168 = scmp.ne.s32.totalorder %s163, %s165
      %p169 = scmp.eq.s32.totalorder %s21, 0
      %p170 = por %p168, %p169
      %p171 = scmp.ne.s32.totalorder %s163, %s165
      %p172 = scmp.eq.s32.totalorder %s26, 1
      %p173 = por %p171, %p172
      %p174 = scmp.ne.s32.totalorder %s165, %s166
      %p175 = scmp.eq.s32.totalorder %s26, 0
      %p176 = por %p174, %p175
      %p177 = scmp.ne.s32.totalorder %s165, %s166
      %p178 = scmp.eq.s32.totalorder %s27, 1
      %p179 = por %p177, %p178
      %p181 = scmp.ne.s32.totalorder %s166, %s180
      %p182 = scmp.eq.s32.totalorder %s27, 0
      %p183 = por %p181, %p182
      %s185 = sadd.s32 %s184, 1
      %p188 = scmp.eq.s32.totalorder %s21, 1
      %p189 = scmp.ne.s32.totalorder %s184, %s186
      %p190 = scmp.eq.s32.totalorder %s21, 0
      %p191 = por %p189, %p190
      %p192 = scmp.ne.s32.totalorder %s184, %s186
      %p193 = scmp.eq.s32.totalorder %s26, 1
      %p194 = por %p192, %p193
      %p195 = scmp.ne.s32.totalorder %s186, %s187
      %p196 = scmp.eq.s32.totalorder %s26, 0
      %p197 = por %p195, %p196
      %p198 = scmp.ne.s32.totalorder %s186, %s187
      %p199 = scmp.eq.s32.totalorder %s27, 1
      %p200 = por %p198, %p199
      %p202 = scmp.ne.s32.totalorder %s187, %s201
      %p203 = scmp.eq.s32.totalorder %s27, 0
      %p204 = por %p202, %p203
      %s205 = ssub.s32 %s28, %s40
      %s206 = ssub.s32 %s29, %s36
      %s207 = sor.u32 %s205, %s206
      %p208 = scmp.eq.s32.totalorder %s207, 0
      %s210 = sadd.s32 %s209, 1
      %s211 = scalar_select %p208, %s209, %s210
      %p214 = pneg %p208
      %p215 = scmp.eq.s32.totalorder %s21, 1
      %p216 = por %p214, %p215
      %p217 = scmp.ne.s32.totalorder %s209, %s212
      %p218 = scmp.eq.s32.totalorder %s21, 0
      %p219 = por %p217, %p218
      %p220 = scmp.ne.s32.totalorder %s209, %s212
      %p221 = scmp.eq.s32.totalorder %s26, 1
      %p222 = por %p220, %p221
      %p223 = scmp.ne.s32.totalorder %s212, %s213
      %p224 = scmp.eq.s32.totalorder %s26, 0
      %p225 = por %p223, %p224
      %p226 = scmp.ne.s32.totalorder %s212, %s213
      %p227 = scmp.eq.s32.totalorder %s27, 1
      %p228 = por %p226, %p227
      %p230 = scmp.ne.s32.totalorder %s213, %s229
      %p231 = scmp.eq.s32.totalorder %s27, 0
      %p232 = por %p230, %p231
      %p233 = scmp.le.s32.totalorder 1, %s21
      %p234 = scmp.lt.s32.totalorder %s21, 3
      %p235 = pnand %p233, %p234
      %p236 = pneg %p235
      // Predicated region
      $region9: #{tpu_custom_call.1} parent=5 // pred_check
        _
      $region10: #{tpu_custom_call.1} parent=5 // pred_check_branch
        %238 = sbr.rel (%p235) target = $region12
      $region11: #{tpu_custom_call.1} parent=5 // pred_region
        %s239 = ssub.s32 %s21, 1
        // Predicated region
        $region13: #{tpu_custom_call.1} parent=11 // pred_check
          %p240 = pneg %p54
        $region14: #{tpu_custom_call.1} parent=11 // pred_check_branch
          %242 = sbr.rel (%p240) target = $region16
        $region15: #{tpu_custom_call.1} parent=11 // pred_region
          %s244 = ssub.s32 16, 16
          %245 = vsyncadd [#allocation5], %s244
          %248 = dma.hbm_to_smem %s0, 16, [#allocation2], [#allocation5]
        $region16: #{tpu_custom_call.1} parent=11 // pred_fallthru
          _
        // Predicated region
        $region17: #{tpu_custom_call.1} parent=11 // pred_check
          %p249 = pneg %p155
        $region18: #{tpu_custom_call.1} parent=11 // pred_check_branch
          %251 = sbr.rel (%p249) target = $region20
        $region19: #{tpu_custom_call.1} parent=11 // pred_region
          %s253 = ssub.s32 1024, 1024
          %254 = vsyncadd [#allocation8], %s253
          %s255 = sshll.u32 [#allocation7], 4
          %s256 = int_to_ptr.vmem [resolvable:$true] %s255
          %261 = dma.hbm_to_vmem [thread:$0]  %s4, 1024, %s256, [#allocation8], 64, 64, 4
        $region20: #{tpu_custom_call.1} parent=11 // pred_fallthru
          _
        // Predicated region
        $region21: #{tpu_custom_call.1} parent=11 // pred_check
          %p262 = pneg %p176
        $region22: #{tpu_custom_call.1} parent=11 // pred_check_branch
          %264 = sbr.rel (%p262) target = $region24
        $region23: #{tpu_custom_call.1} parent=11 // pred_region
          %s266 = ssub.s32 1024, 1024
          %267 = vsyncadd [#allocation8], %s266
          %s268 = sshll.u32 [#allocation9], 4
          %s269 = int_to_ptr.vmem [resolvable:$true] %s268
          %274 = dma.hbm_to_vmem [thread:$0]  %s5, 1024, %s269, [#allocation8], 64, 64, 4
        $region24: #{tpu_custom_call.1} parent=11 // pred_fallthru
          _
        // Predicated region
        $region25: #{tpu_custom_call.1} parent=11 // pred_check
          %p275 = pneg %p197
        $region26: #{tpu_custom_call.1} parent=11 // pred_check_branch
          %277 = sbr.rel (%p275) target = $region28
        $region27: #{tpu_custom_call.1} parent=11 // pred_region
          _
        $region28: #{tpu_custom_call.1} parent=11 // pred_fallthru
          _
      $region12: #{tpu_custom_call.1} parent=5 // pred_fallthru
        _
      %p278 = scmp.lt.s32.totalorder %s21, 2
      // Predicated region
      $region29: #{tpu_custom_call.1} parent=5 // pred_check
        %p279 = pneg %p278
      $region30: #{tpu_custom_call.1} parent=5 // pred_check_branch
        %281 = sbr.rel (%p279) target = $region32
      $region31: #{tpu_custom_call.1} parent=5 // pred_region
        // Predicated region
        $region33: #{tpu_custom_call.1} parent=31 // pred_check
          %p282 = pneg %p76
        $region34: #{tpu_custom_call.1} parent=31 // pred_check_branch
          %284 = sbr.rel (%p282) target = $region36
        $region35: #{tpu_custom_call.1} parent=31 // pred_region
          %s285 = sand.u32 %s66, 1
          %s286 = scalar_lea.sflag [#allocation3], %s285
          %s287 = sand.u32 %s66, 1
          %s288 = smul.addr %s287, 8
          %s289 = scalar_lea.vmem [#allocation6], %s288
          %s290 = smul.u32 2, %s29
          %s292 = ssub.s32 128, 128
          %293 = vsyncadd %s286, %s292
          %s294 = smul.addr %s28, 2
          %s295 = sadd.s32 %s290, %s294
          %s296 = smul.addr %s295, 64
          %s297 = scalar_lea.hbm %s1, %s296
          %s298 = sshll.u32 %s289, 4
          %s299 = int_to_ptr.vmem [resolvable:$true] %s298
          %304 = dma.hbm_to_vmem [thread:$0]  %s297, 128, %s299, %s286, 64, 64, 4
        $region36: #{tpu_custom_call.1} parent=31 // pred_fallthru
          _
        // Predicated region
        $region37: #{tpu_custom_call.1} parent=31 // pred_check
          %p305 = pneg %p102
        $region38: #{tpu_custom_call.1} parent=31 // pred_check_branch
          %307 = sbr.rel (%p305) target = $region40
        $region39: #{tpu_custom_call.1} parent=31 // pred_region
          %p308 = scmp.lt.s32.totalorder %s28, 1
          %s309 = scalar_select %p308, %s28, 1
          %s310 = scalar_lea.vmem %s2, %s309
        $region40: #{tpu_custom_call.1} parent=31 // pred_fallthru
          _
        // Predicated region
        $region41: #{tpu_custom_call.1} parent=31 // pred_check
          %p311 = pneg %p128
        $region42: #{tpu_custom_call.1} parent=31 // pred_check_branch
          %313 = sbr.rel (%p311) target = $region44
        $region43: #{tpu_custom_call.1} parent=31 // pred_region
          %p314 = scmp.lt.s32.totalorder %s28, 1
          %s315 = scalar_select %p314, %s28, 1
          %s316 = scalar_lea.vmem %s3, %s315
        $region44: #{tpu_custom_call.1} parent=31 // pred_fallthru
          _
      $region32: #{tpu_custom_call.1} parent=5 // pred_fallthru
        _
      %p317 = scmp.le.s32.totalorder 1, %s21
      %p318 = scmp.lt.s32.totalorder %s21, 3
      %p319 = pnand %p317, %p318
      %p320 = pneg %p319
      // Predicated region
      $region45: #{tpu_custom_call.1} parent=5 // pred_check
        _
      $region46: #{tpu_custom_call.1} parent=5 // pred_check_branch
        %322 = sbr.rel (%p319) target = $region48
      $region47: #{tpu_custom_call.1} parent=5 // pred_region
        %s323 = ssub.s32 %s21, 1
        // Predicated region
        $region49: #{tpu_custom_call.1} parent=47 // pred_check
          %p324 = pneg %p54
        $region50: #{tpu_custom_call.1} parent=47 // pred_check_branch
          %326 = sbr.rel (%p324) target = $region52
        $region51: #{tpu_custom_call.1} parent=47 // pred_region
          %327 = dma.done [#allocation5], 16
        $region52: #{tpu_custom_call.1} parent=47 // pred_fallthru
          _
        %s328 = sand.u32 %s69, 1
        %s329 = scalar_lea.sflag [#allocation3], %s328
        %s330 = sand.u32 %s69, 1
        %s331 = smul.addr %s330, 8
        %s332 = scalar_lea.vmem [#allocation6], %s331
        // Predicated region
        $region53: #{tpu_custom_call.1} parent=47 // pred_check
          %p333 = pneg %p82
        $region54: #{tpu_custom_call.1} parent=47 // pred_check_branch
          %335 = sbr.rel (%p333) target = $region56
        $region55: #{tpu_custom_call.1} parent=47 // pred_region
          %336 = dma.done %s329, 128
        $region56: #{tpu_custom_call.1} parent=47 // pred_fallthru
          _
        // Predicated region
        $region57: #{tpu_custom_call.1} parent=47 // pred_check
          %p337 = pneg %p155
        $region58: #{tpu_custom_call.1} parent=47 // pred_check_branch
          %339 = sbr.rel (%p337) target = $region60
        $region59: #{tpu_custom_call.1} parent=47 // pred_region
          %340 = dma.done [#allocation8], 1024
        $region60: #{tpu_custom_call.1} parent=47 // pred_fallthru
          _
        // Predicated region
        $region61: #{tpu_custom_call.1} parent=47 // pred_check
          %p341 = pneg %p176
        $region62: #{tpu_custom_call.1} parent=47 // pred_check_branch
          %343 = sbr.rel (%p341) target = $region64
        $region63: #{tpu_custom_call.1} parent=47 // pred_region
          %344 = dma.done [#allocation8], 1024
        $region64: #{tpu_custom_call.1} parent=47 // pred_fallthru
          _
        %345 = sfence
        %p346 = pneg %p54
        %p347 = pneg %p51
        %s348 = sand.u32 %s69, 1
        %s349 = scalar_lea.sflag [#allocation3], %s348
        %s350 = sand.u32 %s69, 1
        %s351 = smul.addr %s350, 8
        %s352 = scalar_lea.vmem [#allocation6], %s351
        %p353 = pneg %p82
        %p354 = pneg %p79
        %p355 = scmp.lt.s32.totalorder %s30, 1
        %s356 = scalar_select %p355, %s30, 1
        %s357 = scalar_lea.vmem %s2, %s356
        %p358 = pneg %p108
        %p359 = pneg %p105
        %p360 = scmp.lt.s32.totalorder %s30, 1
        %s361 = scalar_select %p360, %s30, 1
        %s362 = scalar_lea.vmem %s3, %s361
        %p363 = pneg %p134
        %p364 = pneg %p131
        %p365 = pneg %p155
        %p366 = pneg %p152
        %p367 = pneg %p176
        %p368 = pneg %p173
        %p369 = pneg %p197
        %p370 = pneg %p194
        %p371 = pneg %p225
        %p372 = pneg %p222
        %s373 = sand.u32 %s212, 1
        %s374 = scalar_lea.sflag [#allocation4], %s373
        %s375 = sand.u32 %s212, 1
        %s376 = smul.addr %s375, 16
        %s377 = scalar_lea.vmem [#allocation10], %s376
        %s378 = smul.u32 2, %s31
        %p379 = scmp.lt.s32.totalorder %s30, 1
        %s380 = scalar_select %p379, %s30, 1
        %s381 = scalar_lea.vmem %s2, %s380
        %p382 = scmp.lt.s32.totalorder %s30, 1
        %s383 = scalar_select %p382, %s30, 1
        %s384 = scalar_lea.vmem %s3, %s383
        %s385 = smul.u32 2, %s31
        %v387 = vld [vmem:[%s332] sm:$0xf]
        %v388 = vld [vmem:[%s332 + $0x4] sm:$0xf]
        %v389 = vld [vmem:[#allocation7] sm:$0xf]
        %v390 = vld [vmem:[#allocation7 + $0x4] sm:$0xf]
        %v391 = vld [vmem:[#allocation7 + $0x8] sm:$0xf]
        %v392 = vld [vmem:[#allocation7 + $0xc] sm:$0xf]
        %v393 = vld [vmem:[#allocation7 + $0x10] sm:$0xf]
        %v394 = vld [vmem:[#allocation7 + $0x14] sm:$0xf]
        %v395 = vld [vmem:[#allocation7 + $0x18] sm:$0xf]
        %v396 = vld [vmem:[#allocation7 + $0x1c] sm:$0xf]
        %v397 = vld [vmem:[#allocation7 + $0x20] sm:$0xf]
        %v398 = vld [vmem:[#allocation7 + $0x24] sm:$0xf]
        %v399 = vld [vmem:[#allocation7 + $0x28] sm:$0xf]
        %v400 = vld [vmem:[#allocation7 + $0x2c] sm:$0xf]
        %v401 = vld [vmem:[#allocation7 + $0x30] sm:$0xf]
        %v402 = vld [vmem:[#allocation7 + $0x34] sm:$0xf]
        %v403 = vld [vmem:[#allocation7 + $0x38] sm:$0xf]
        %v404 = vld [vmem:[#allocation7 + $0x3c] sm:$0xf]
        %v405 = vld [vmem:[%s381] sm:$0x1]
        %v407 = vlaneseq
        %v408 = vshrl.u32 %v407, 7
        %v409 = vsub.s32 0, %v408
        %v410 = vrot.slane %v405, %v409
        %v414 = vunpack.c.l.b16 %v387
        %v415 = vunpack.c.l.b16 %v388
        %v416 = vpack.c.b16 %v415, %v414
        %v434 = vunpack.c.l.b16 %v389
        %v435 = vunpack.c.l.b16 %v390
        %v436 = vunpack.c.l.b16 %v391
        %v437 = vunpack.c.l.b16 %v392
        %v438 = vunpack.c.l.b16 %v393
        %v439 = vunpack.c.l.b16 %v394
        %v440 = vunpack.c.l.b16 %v395
        %v441 = vunpack.c.l.b16 %v396
        %v442 = vunpack.c.l.b16 %v397
        %v443 = vunpack.c.l.b16 %v398
        %v444 = vunpack.c.l.b16 %v399
        %v445 = vunpack.c.l.b16 %v400
        %v446 = vunpack.c.l.b16 %v401
        %v447 = vunpack.c.l.b16 %v402
        %v448 = vunpack.c.l.b16 %v403
        %v449 = vunpack.c.l.b16 %v404
        %v450 = vpack.c.b16 %v435, %v434
        %v451 = vpack.c.b16 %v437, %v436
        %v452 = vpack.c.b16 %v439, %v438
        %v453 = vpack.c.b16 %v441, %v440
        %v454 = vpack.c.b16 %v443, %v442
        %v455 = vpack.c.b16 %v445, %v444
        %v456 = vpack.c.b16 %v447, %v446
        %v457 = vpack.c.b16 %v449, %v448
        %466 = vmatprep.subr.bf16.mxu0 0
        %467 = vmatpush1.bf16.msra.mxu0 %v457
        %468 = vmatprep.subr.bf16.mxu0 0
        %469 = vmatpush1.bf16.msra.mxu0 %v456
        %470 = vmatprep.subr.bf16.mxu0 0
        %471 = vmatpush1.bf16.msra.mxu0 %v455
        %472 = vmatprep.subr.bf16.mxu0 0
        %473 = vmatpush1.bf16.msra.mxu0 %v454
        %474 = vmatprep.subr.bf16.mxu0 0
        %475 = vmatpush1.bf16.msra.mxu0 %v453
        %476 = vmatprep.subr.bf16.mxu0 0
        %477 = vmatpush1.bf16.msra.mxu0 %v452
        %478 = vmatprep.subr.bf16.mxu0 0
        %479 = vmatpush1.bf16.msra.mxu0 %v451
        %480 = vmatprep.subr.bf16.mxu0 0
        %481 = vmatpush1.bf16.msra.mxu0 %v450
        %482 = vmatprep.subr.bf16.mxu0 0
        %483 = vmatpush2.bf16.msra.mxu0 0
        %484 = vmatprep.subr.bf16.mxu0 0
        %485 = vmatpush2.bf16.msra.mxu0 0
        %486 = vmatprep.subr.bf16.mxu0 0
        %487 = vmatpush2.bf16.msra.mxu0 0
        %488 = vmatprep.subr.bf16.mxu0 0
        %489 = vmatpush2.bf16.msra.mxu0 0
        %490 = vmatprep.subr.bf16.mxu0 0
        %491 = vmatpush2.bf16.msra.mxu0 0
        %492 = vmatprep.subr.bf16.mxu0 0
        %493 = vmatpush2.bf16.msra.mxu0 0
        %494 = vmatprep.subr.bf16.mxu0 0
        %495 = vmatpush2.bf16.msra.mxu0 0
        %496 = vmatprep.subr.bf16.mxu0 0
        %497 = vmatpush2.bf16.msra.mxu0 0
        %498 = vmatprep.mubr.bf16.mxu0 0
        %499 = vmatmul.mubr.bf16.gmra.mxu0 %v416
        %v500 = vpop.f32.mrf.mxu0
        %v501 = vadd.f32 %v410, %v500
        %v502 = vpop.f32.mrf.mxu0
        %v503 = vpop.f32.mrf.mxu0
        %v504 = vadd.f32 %v410, %v503
        %v505 = vpop.f32.mrf.mxu0
        %506 = vdwg.mxu0
        %v507 = vld [vmem:[%s384] sm:$0x1]
        %v509 = vlaneseq
        %v510 = vshrl.u32 %v509, 7
        %v511 = vsub.s32 0, %v510
        %v512 = vrot.slane %v507, %v511
        %v514 = vadd.f32 %v501, %v512
        %v515 = vadd.f32 %v504, %v512
        %s516 = sld [smem:[#allocation2]]
        %s517 = sld [smem:[#allocation2 + $0x1]]
        %v518 = vmul.f32 %v501, %v501
        %v519 = vmul.f32 %v504, %v504
        %v520 = vmul.f32 %v501, %v518
        %v521 = vmul.f32 %v504, %v519
        %v522 = vmul.f32 %v520, 0.044715
        %v523 = vmul.f32 %v521, 0.044715
        %v524 = vadd.f32 %v501, %v522
        %v525 = vadd.f32 %v504, %v523
        %v526 = vmul.f32 %v524, 0.7978846
        %v527 = vmul.f32 %v525, 0.7978846
        %v528 = vtanh.pop %v526
        %v529 = vtanh.pop %v527
        %v530 = vadd.f32 %v528, 1.0
        %v531 = vadd.f32 %v529, 1.0
        %v532 = vmul.f32 %v530, 0.5
        %v533 = vmul.f32 %v531, 0.5
        %v534 = vmul.f32 %v501, %v532
        %v535 = vmul.f32 %v504, %v533
        %v536 = vstv %s516
        %v537 = vmul.f32 %v536, %v534
        %v538 = vmul.f32 %v536, %v535
        %v539 = vmul.f32 %v514, %v514
        %v540 = vmul.f32 %v515, %v515
        %v541 = vmul.f32 %v514, %v539
        %v542 = vmul.f32 %v515, %v540
        %v543 = vmul.f32 %v541, 0.044715
        %v544 = vmul.f32 %v542, 0.044715
        %v545 = vadd.f32 %v514, %v543
        %v546 = vadd.f32 %v515, %v544
        %v547 = vmul.f32 %v545, 0.7978846
        %v548 = vmul.f32 %v546, 0.7978846
        %v549 = vtanh.pop %v547
        %v550 = vtanh.pop %v548
        %v551 = vadd.f32 %v549, 1.0
        %v552 = vadd.f32 %v550, 1.0
        %v553 = vmul.f32 %v551, 0.5
        %v554 = vmul.f32 %v552, 0.5
        %v555 = vmul.f32 %v514, %v553
        %v556 = vmul.f32 %v515, %v554
        %v557 = vstv %s517
        %v558 = vmul.f32 %v557, %v555
        %v559 = vmul.f32 %v557, %v556
        %v560 = vadd.f32 %v537, %v558
        %v561 = vadd.f32 %v538, %v559
        %v562 = vpack.c.bf16 %v561, %v560
        %v563 = vld [vmem:[#allocation9] sm:$0xf]
        %v564 = vld [vmem:[#allocation9 + $0x4] sm:$0xf]
        %v565 = vld [vmem:[#allocation9 + $0x8] sm:$0xf]
        %v566 = vld [vmem:[#allocation9 + $0xc] sm:$0xf]
        %v567 = vld [vmem:[#allocation9 + $0x10] sm:$0xf]
        %v568 = vld [vmem:[#allocation9 + $0x14] sm:$0xf]
        %v569 = vld [vmem:[#allocation9 + $0x18] sm:$0xf]
        %v570 = vld [vmem:[#allocation9 + $0x1c] sm:$0xf]
        %v571 = vld [vmem:[#allocation9 + $0x20] sm:$0xf]
        %v572 = vld [vmem:[#allocation9 + $0x24] sm:$0xf]
        %v573 = vld [vmem:[#allocation9 + $0x28] sm:$0xf]
        %v574 = vld [vmem:[#allocation9 + $0x2c] sm:$0xf]
        %v575 = vld [vmem:[#allocation9 + $0x30] sm:$0xf]
        %v576 = vld [vmem:[#allocation9 + $0x34] sm:$0xf]
        %v577 = vld [vmem:[#allocation9 + $0x38] sm:$0xf]
        %v578 = vld [vmem:[#allocation9 + $0x3c] sm:$0xf]
        %v579 = vld [vmem:[%s6] sm:$0x1]
        %v581 = vlaneseq
        %v582 = vshrl.u32 %v581, 7
        %v583 = vsub.s32 0, %v582
        %v584 = vrot.slane %v579, %v583
        %v602 = vunpack.c.l.b16 %v563
        %v603 = vunpack.c.l.b16 %v564
        %v604 = vunpack.c.l.b16 %v565
        %v605 = vunpack.c.l.b16 %v566
        %v606 = vunpack.c.l.b16 %v567
        %v607 = vunpack.c.l.b16 %v568
        %v608 = vunpack.c.l.b16 %v569
        %v609 = vunpack.c.l.b16 %v570
        %v610 = vunpack.c.l.b16 %v571
        %v611 = vunpack.c.l.b16 %v572
        %v612 = vunpack.c.l.b16 %v573
        %v613 = vunpack.c.l.b16 %v574
        %v614 = vunpack.c.l.b16 %v575
        %v615 = vunpack.c.l.b16 %v576
        %v616 = vunpack.c.l.b16 %v577
        %v617 = vunpack.c.l.b16 %v578
        %v618 = vpack.c.b16 %v603, %v602
        %v619 = vpack.c.b16 %v605, %v604
        %v620 = vpack.c.b16 %v607, %v606
        %v621 = vpack.c.b16 %v609, %v608
        %v622 = vpack.c.b16 %v611, %v610
        %v623 = vpack.c.b16 %v613, %v612
        %v624 = vpack.c.b16 %v615, %v614
        %v625 = vpack.c.b16 %v617, %v616
        %634 = vmatprep.subr.bf16.mxu0 0
        %635 = vmatpush1.bf16.msra.mxu0 %v625
        %636 = vmatprep.subr.bf16.mxu0 0
        %637 = vmatpush1.bf16.msra.mxu0 %v624
        %638 = vmatprep.subr.bf16.mxu0 0
        %639 = vmatpush1.bf16.msra.mxu0 %v623
        %640 = vmatprep.subr.bf16.mxu0 0
        %641 = vmatpush1.bf16.msra.mxu0 %v622
        %642 = vmatprep.subr.bf16.mxu0 0
        %643 = vmatpush1.bf16.msra.mxu0 %v621
        %644 = vmatprep.subr.bf16.mxu0 0
        %645 = vmatpush1.bf16.msra.mxu0 %v620
        %646 = vmatprep.subr.bf16.mxu0 0
        %647 = vmatpush1.bf16.msra.mxu0 %v619
        %648 = vmatprep.subr.bf16.mxu0 0
        %649 = vmatpush1.bf16.msra.mxu0 %v618
        %650 = vmatprep.subr.bf16.mxu0 0
        %651 = vmatpush2.bf16.msra.mxu0 0
        %652 = vmatprep.subr.bf16.mxu0 0
        %653 = vmatpush2.bf16.msra.mxu0 0
        %654 = vmatprep.subr.bf16.mxu0 0
        %655 = vmatpush2.bf16.msra.mxu0 0
        %656 = vmatprep.subr.bf16.mxu0 0
        %657 = vmatpush2.bf16.msra.mxu0 0
        %658 = vmatprep.subr.bf16.mxu0 0
        %659 = vmatpush2.bf16.msra.mxu0 0
        %660 = vmatprep.subr.bf16.mxu0 0
        %661 = vmatpush2.bf16.msra.mxu0 0
        %662 = vmatprep.subr.bf16.mxu0 0
        %663 = vmatpush2.bf16.msra.mxu0 0
        %664 = vmatprep.subr.bf16.mxu0 0
        %665 = vmatpush2.bf16.msra.mxu0 0
        %666 = vmatprep.mubr.bf16.mxu0 0
        %667 = vmatmul.mubr.bf16.gmra.mxu0 %v562
        %v668 = vpop.f32.mrf.mxu0
        %v669 = vadd.f32 %v584, %v668
        %v670 = vpop.f32.mrf.mxu0
        %v671 = vpop.f32.mrf.mxu0
        %v672 = vadd.f32 %v584, %v671
        %v673 = vpop.f32.mrf.mxu0
        %674 = vdwg.mxu0
        %675 = vst [vmem:[%s377] sm:$0xff] %v669
        %676 = vst [vmem:[%s377 + $0x8] sm:$0xff] %v672
        %s677 = sand.u32 %s212, 1
        %s678 = scalar_lea.sflag [#allocation4], %s677
        %s679 = sand.u32 %s212, 1
        %s680 = smul.addr %s679, 16
        %s681 = scalar_lea.vmem [#allocation10], %s680
        // Predicated region
        $region65: #{tpu_custom_call.1} parent=47 // pred_check
          %p682 = pneg %p222
        $region66: #{tpu_custom_call.1} parent=47 // pred_check_branch
          %684 = sbr.rel (%p682) target = $region68
        $region67: #{tpu_custom_call.1} parent=47 // pred_region
          %s685 = smul.u32 2, %s31
          %s687 = ssub.s32 256, 256
          %688 = vsyncadd %s678, %s687
          %s689 = smul.addr %s30, 2
          %s690 = sadd.s32 %s685, %s689
          %s691 = smul.addr %s690, 128
          %s692 = scalar_lea.hbm %s7, %s691
          %s693 = sshll.u32 %s681, 4
          %s694 = int_to_ptr.vmem [resolvable:$true] %s693
          %699 = dma.vmem_to_hbm [thread:$0]  %s694, 256, %s692, %s678, 128, 128, 8
        $region68: #{tpu_custom_call.1} parent=47 // pred_fallthru
          _
      $region48: #{tpu_custom_call.1} parent=5 // pred_fallthru
        _
      %p700 = scmp.le.s32.totalorder 2, %s21
      // Predicated region
      $region69: #{tpu_custom_call.1} parent=5 // pred_check
        %p701 = pneg %p700
      $region70: #{tpu_custom_call.1} parent=5 // pred_check_branch
        %703 = sbr.rel (%p701) target = $region72
      $region71: #{tpu_custom_call.1} parent=5 // pred_region
        %s704 = ssub.s32 %s21, 2
        // Predicated region
        $region73: #{tpu_custom_call.1} parent=71 // pred_check
          %p705 = pneg %p228
        $region74: #{tpu_custom_call.1} parent=71 // pred_check_branch
          %707 = sbr.rel (%p705) target = $region76
        $region75: #{tpu_custom_call.1} parent=71 // pred_region
          %s708 = sand.u32 %s213, 1
          %s709 = scalar_lea.sflag [#allocation4], %s708
          %s710 = sand.u32 %s213, 1
          %s711 = smul.addr %s710, 16
          %s712 = scalar_lea.vmem [#allocation10], %s711
          %713 = dma.done %s709, 256
        $region76: #{tpu_custom_call.1} parent=71 // pred_fallthru
          _
      $region72: #{tpu_custom_call.1} parent=5 // pred_fallthru
        _
    $region6: #{tpu_custom_call.1} parent=1 // loop_footer
      %s25 = sadd.s32 1, %s21
    $region7: #{tpu_custom_call.1} parent=1 // loop_footer_branch
      %20 = sbr.rel target = $region3
    $region8: #{tpu_custom_call.1} parent=1 // loop_exit
      _
    %714 = vsyncpa [#allocation3], 1
    %s715 = scalar_lea.sflag [#allocation3], 1
    %716 = vsyncpa %s715, 1
    %717 = vsyncpa [#allocation8], 1
    %718 = vsyncpa [#allocation4], 1
    %s719 = scalar_lea.sflag [#allocation4], 1
    %720 = vsyncpa %s719, 1
    %721 = vsyncpa [#allocation5], 1
    %s722 = scalar_lea.sflag [#allocation5], 1
    %723 = vsyncpa %s722, 1

</llo_original>
